<compile_context>
chip_gen: v5e
topology: v5e:2x2
jax: 0.10.0
libtpu: 0.0.40
codegen_flags: <defaults>
</compile_context>

<pallas_src>
import jax
import jax.numpy as jnp
from jax.experimental import pallas as pl
from jax.experimental.pallas import tpu as pltpu


def _round_up(x, m):
    return (x + m - 1) // m * m


def _make_mlp_kernel(num_layers, negative_slope=0.01):
    """Fused MLP kernel. Ref order: (x, w0, b0, w1, b1, ..., out)."""

    def kernel(*refs):
        x_ref = refs[0]
        param_refs = refs[1:1 + 2 * num_layers]
        o_ref = refs[1 + 2 * num_layers]

        h = x_ref[...]                              # (TILE_B, d0) bf16 activations
        for i in range(num_layers):
            w = param_refs[2 * i][...]              # (d_i, d_{i+1}) bf16, VMEM-resident
            b = param_refs[2 * i + 1][...]          # (1, d_{i+1}) f32
            lhs = h if h.dtype == jnp.bfloat16 else h.astype(jnp.bfloat16)
            # MXU matmul: bf16 inputs, f32 accumulate; bias add in f32 on the VPU.
            h = jnp.dot(lhs, w, preferred_element_type=jnp.float32) + b
            if i < num_layers - 1:
                # LeakyReLU (0 < slope < 1): single VPU max instead of cmp+select.
                h = jnp.maximum(h, negative_slope * h)
        o_ref[...] = h.astype(o_ref.dtype)

    return kernel


def prepare_feedforward_params(weights, biases):
    """One-time parameter prep (hoisted out of the per-call path).

    Pads *hidden* feature widths to multiples of 128 lanes (exact: zero pad)
    and casts weights to bf16 (MXU-native, half the VMEM/HBM bytes). The input
    and output feature dims are left at their true widths so the HBM-bound
    activation stream carries no padding bytes. Biases stay f32.

    weights: list of (in_i, out_i) float arrays (already (in, out), i.e. W_pt.T)
    biases:  list of (out_i,) or (1, out_i) float arrays
    """
    assert len(weights) == len(biases)
    n = len(weights)
    dims = [weights[0].shape[0]] + [w.shape[1] for w in weights]
    dims_p = list(dims)
    for i in range(1, n):               # pad hidden widths only; keep in/out true
        dims_p[i] = _round_up(dims[i], 128)

    w_p, b_p = [], []
    for i in range(n):
        w = jnp.asarray(weights[i], jnp.float32)
        b = jnp.reshape(jnp.asarray(biases[i], jnp.float32), (1, -1))
        wp = jnp.pad(w, ((0, dims_p[i] - dims[i]), (0, dims_p[i + 1] - dims[i + 1])))
        bp = jnp.pad(b, ((0, 0), (0, dims_p[i + 1] - dims[i + 1])))
        w_p.append(wp.astype(jnp.bfloat16))
        b_p.append(bp)
    return {"weights": w_p, "biases": b_p, "dims": dims, "dims_p": dims_p}


def _vmem_budget_bytes(tile_b, dims_p, n):
    """Per-generation VMEM request with headroom (v7x is only 64 MiB per TC)."""
    bytes_x = 2 * tile_b * dims_p[0] * 2                         # bf16 in, 2-buffered
    bytes_o = 2 * tile_b * dims_p[-1] * 4                        # f32 out, 2-buffered
    bytes_w = sum(2 * dims_p[i] * dims_p[i + 1] * 2 for i in range(n))
    bytes_b = sum(2 * dims_p[i + 1] * 4 for i in range(n))
    bytes_h = 3 * tile_b * max(dims_p) * 4                       # live intermediates
    est = bytes_x + bytes_o + bytes_w + bytes_b + bytes_h
    try:
        cap = pltpu.get_tpu_info().vmem_capacity_bytes
    except Exception:
        cap = 64 * 1024 * 1024                                   # conservative fallback
    # ~20% headroom for compiler-internal scratch; never request below 16 MiB.
    return int(min(0.8 * cap, max(16 * 1024 * 1024, 2 * est)))


def _build_pallas_call(n, dims_p, tile_b, grid, vmem_limit, negative_slope,
                       single_buffer_params):
    in_specs = [pl.BlockSpec((tile_b, dims_p[0]), lambda i: (i, 0))]
    # Constant index_map: weight/bias blocks never change across grid steps, so
    # the pipeline keeps them resident; single-buffer them (no second copy needed).
    pkw = dict(pipeline_mode=pl.Buffered(1)) if single_buffer_params else {}
    for li in range(n):
        in_specs.append(
            pl.BlockSpec((dims_p[li], dims_p[li + 1]), lambda i: (0, 0), **pkw))
        in_specs.append(pl.BlockSpec((1, dims_p[li + 1]), lambda i: (0, 0), **pkw))
    out_specs = pl.BlockSpec((tile_b, dims_p[-1]), lambda i: (i, 0))
    return pl.pallas_call(
        _make_mlp_kernel(n, negative_slope),
        out_shape=jax.ShapeDtypeStruct((grid[0] * tile_b, dims_p[-1]), jnp.float32),
        grid=grid,
        in_specs=in_specs,
        out_specs=out_specs,
        compiler_params=pltpu.CompilerParams(
            dimension_semantics=("parallel",),   # shard batch tiles across v7x's 2 TCs
            vmem_limit_bytes=vmem_limit,
        ),
    )


def feedforward_pallas(x, params, negative_slope=0.01, tile_b=None):
    """Fused, batch-tiled Pallas forward for Feedforward (inference).

    x:      (B, structure[0]) float
    params: output of prepare_feedforward_params
    Returns (B, structure[-1]) float32.
    """
    w_p, b_p = params["weights"], params["biases"]
    dims, dims_p = params["dims"], params["dims_p"]
    n = len(w_p)
    B, in_dim = x.shape
    assert in_dim == dims[0]

    # Batch tile: multiple of 16 (bf16 sublane pack). Small B -> just round up
    # (no forced 128-row padding). Large B -> big tiles to amortize per-step
    # overhead, but keep >=2 grid steps so both v7x TensorCores get work.
    if tile_b is None:
        if B <= 256:
            tile_b = _round_up(B, 16)
        else:
            tile_b = min(2048, _round_up(pl.cdiv(B, 2), 16))
    tile_b = max(16, _round_up(tile_b, 16))
    B_p = _round_up(B, tile_b)

    # bf16 activation stream (halves input DMA bytes; numerically identical to
    # the bf16-LHS matmul the kernel already performs).
    x_p = x.astype(jnp.bfloat16)
    if B_p != B:
        x_p = jnp.pad(x_p, ((0, B_p - B), (0, 0)))

    grid = (B_p // tile_b,)
    vmem_limit = _vmem_budget_bytes(tile_b, dims_p, n)

    args = [x_p]
    for li in range(n):
        args.append(w_p[li])
        args.append(b_p[li])

    try:
        call = _build_pallas_call(n, dims_p, tile_b, grid, vmem_limit,
                                  negative_slope, single_buffer_params=True)
        out_p = call(*args)
    except Exception:
        # Fallback if pl.Buffered(1) single-buffering is rejected by this version.
        call = _build_pallas_call(n, dims_p, tile_b, grid, vmem_limit,
                                  negative_slope, single_buffer_params=False)
        out_p = call(*args)

    # Output is already at true feature width; only trim padded batch rows.
    return out_p if B_p == B else out_p[:B]


def init_feedforward_params(key, structure):
    """Deterministic init mimicking PyTorch nn.Linear default (U(+/- 1/sqrt(fan_in)))."""
    weights, biases = [], []
    for i in range(len(structure) - 1):
        fan_in, fan_out = structure[i], structure[i + 1]
        key, kw, kb = jax.random.split(key, 3)
        bound = 1.0 / jnp.sqrt(jnp.float32(fan_in))
        # Stored directly as (in, out): equivalent to W_pt.T where W_pt is (out, in).
        w = jax.random.uniform(kw, (fan_in, fan_out), jnp.float32, -bound, bound)
        b = jax.random.uniform(kb, (1, fan_out), jnp.float32, -bound, bound)
        weights.append(w)
        biases.append(b)
    return weights, biases


def feedforward_reference_f32(x, weights, biases, negative_slope=0.01):
    """Pure-JAX f32 reference matching the PyTorch forward."""
    h = x
    n = len(weights)
    for i in range(n):
        h = h @ weights[i] + jnp.reshape(biases[i], (1, -1))
        if i < n - 1:
            h = jnp.where(h > 0, h, negative_slope * h)
    return h


def feedforward_reference_bf16(x, weights, biases, negative_slope=0.01):
    """Pure-JAX reference mirroring the kernel's bf16-input/weight, f32-accumulate math."""
    h = x.astype(jnp.float32)
    n = len(weights)
    for i in range(n):
        h = jnp.dot(h.astype(jnp.bfloat16), weights[i].astype(jnp.bfloat16),
                    preferred_element_type=jnp.float32) + jnp.reshape(biases[i], (1, -1))
        if i < n - 1:
            h = jnp.maximum(h, negative_slope * h)
    return h


if __name__ == "__main__":
    # Feedforward(structure=[32, 64, 48, 16]) -> Linear(32,64), LeakyReLU,
    # Linear(64,48), LeakyReLU, Linear(48,16). No dropout, no final activation.
    structure = [32, 64, 48, 16]
    batch = 8

    key = jax.random.PRNGKey(0)
    key, kx = jax.random.split(key)
    x = jax.random.normal(kx, (batch, structure[0]), jnp.float32)

    weights, biases = init_feedforward_params(key, structure)
    params = prepare_feedforward_params(weights, biases)   # one-time pad/cast

    out = feedforward_pallas(x, params)
    out = jax.block_until_ready(out)
    assert out.shape == (batch, structure[-1])

    # Tight check vs a reference using the same bf16/f32-accumulate math.
    ref_bf16 = feedforward_reference_bf16(x, weights, biases)
    assert jnp.allclose(out, ref_bf16, atol=1e-4, rtol=1e-4), "mismatch vs bf16 reference"

    # Loose check vs the full-f32 PyTorch-equivalent forward (bf16 drift only).
    ref_f32 = feedforward_reference_f32(x, weights, biases)
    assert jnp.allclose(out, ref_f32, atol=5e-2, rtol=5e-2), "mismatch vs f32 reference"

    print("KERNEL_OK")
</pallas_src>

<mosaic_0001>
module attributes {stable_mosaic.version = 11 : i64} {
  func.func @kernel(%arg0: i32, %arg1: memref<16x32xbf16, #tpu.memory_space<vmem>>, %arg2: memref<32x128xbf16, #tpu.memory_space<vmem>>, %arg3: memref<1x128xf32, #tpu.memory_space<vmem>>, %arg4: memref<128x128xbf16, #tpu.memory_space<vmem>>, %arg5: memref<1x128xf32, #tpu.memory_space<vmem>>, %arg6: memref<128x16xbf16, #tpu.memory_space<vmem>>, %arg7: memref<1x16xf32, #tpu.memory_space<vmem>>, %arg8: memref<16x16xf32, #tpu.memory_space<vmem>>) attributes {dimension_semantics = [#tpu.dimension_semantics<parallel>], iteration_bounds = array<i64: 1>, scalar_prefetch = 0 : i64, scratch_operands = 0 : i64, tpu.core_type = #tpu.core_type<tc>, window_params = [{transform_indices = @transform_0, window_bounds = array<i64: 16, 32>}, {pipeline_mode = #tpu.pipeline_mode<synchronous>, transform_indices = @transform_1, window_bounds = array<i64: 32, 128>}, {pipeline_mode = #tpu.pipeline_mode<synchronous>, transform_indices = @transform_2, window_bounds = array<i64: 1, 128>}, {pipeline_mode = #tpu.pipeline_mode<synchronous>, transform_indices = @transform_3, window_bounds = array<i64: 128, 128>}, {pipeline_mode = #tpu.pipeline_mode<synchronous>, transform_indices = @transform_4, window_bounds = array<i64: 1, 128>}, {pipeline_mode = #tpu.pipeline_mode<synchronous>, transform_indices = @transform_5, window_bounds = array<i64: 128, 16>}, {pipeline_mode = #tpu.pipeline_mode<synchronous>, transform_indices = @transform_6, window_bounds = array<i64: 1, 16>}, {transform_indices = @transform_7, window_bounds = array<i64: 16, 16>}]} {
    %c0 = arith.constant 0 : index
    %c0_0 = arith.constant 0 : index
    %0 = vector.load %arg1[%c0, %c0_0] : memref<16x32xbf16, #tpu.memory_space<vmem>>, vector<16x32xbf16>
    %c0_1 = arith.constant 0 : index
    %c0_2 = arith.constant 0 : index
    %1 = vector.load %arg2[%c0_1, %c0_2] : memref<32x128xbf16, #tpu.memory_space<vmem>>, vector<32x128xbf16>
    %c0_3 = arith.constant 0 : index
    %c0_4 = arith.constant 0 : index
    %2 = vector.load %arg3[%c0_3, %c0_4] : memref<1x128xf32, #tpu.memory_space<vmem>>, vector<1x128xf32>
    %cst = arith.constant dense<0.000000e+00> : vector<16x128xf32>
    %3 = tpu.matmul %0, %1, %cst {dimension_numbers = #tpu.dot_dimension_numbers<[1], [0], [0], [1], [0, 0, 1, 1], [], []>} : vector<16x32xbf16>, vector<32x128xbf16>, vector<16x128xf32> -> vector<16x128xf32>
    %4 = vector.broadcast %2 : vector<1x128xf32> to vector<16x128xf32>
    %5 = arith.addf %3, %4 : vector<16x128xf32>
    %cst_5 = arith.constant 0.00999999977 : f32
    %6 = vector.broadcast %cst_5 : f32 to vector<16x128xf32>
    %7 = arith.mulf %6, %5 : vector<16x128xf32>
    %8 = arith.maximumf %5, %7 : vector<16x128xf32>
    %c0_6 = arith.constant 0 : index
    %c0_7 = arith.constant 0 : index
    %9 = vector.load %arg4[%c0_6, %c0_7] : memref<128x128xbf16, #tpu.memory_space<vmem>>, vector<128x128xbf16>
    %c0_8 = arith.constant 0 : index
    %c0_9 = arith.constant 0 : index
    %10 = vector.load %arg5[%c0_8, %c0_9] : memref<1x128xf32, #tpu.memory_space<vmem>>, vector<1x128xf32>
    %11 = arith.truncf %8 : vector<16x128xf32> to vector<16x128xbf16>
    %cst_10 = arith.constant dense<0.000000e+00> : vector<16x128xf32>
    %12 = tpu.matmul %11, %9, %cst_10 {dimension_numbers = #tpu.dot_dimension_numbers<[1], [0], [0], [1], [0, 0, 1, 1], [], []>} : vector<16x128xbf16>, vector<128x128xbf16>, vector<16x128xf32> -> vector<16x128xf32>
    %13 = vector.broadcast %10 : vector<1x128xf32> to vector<16x128xf32>
    %14 = arith.addf %12, %13 : vector<16x128xf32>
    %cst_11 = arith.constant 0.00999999977 : f32
    %15 = vector.broadcast %cst_11 : f32 to vector<16x128xf32>
    %16 = arith.mulf %15, %14 : vector<16x128xf32>
    %17 = arith.maximumf %14, %16 : vector<16x128xf32>
    %c0_12 = arith.constant 0 : index
    %c0_13 = arith.constant 0 : index
    %18 = vector.load %arg6[%c0_12, %c0_13] : memref<128x16xbf16, #tpu.memory_space<vmem>>, vector<128x16xbf16>
    %c0_14 = arith.constant 0 : index
    %c0_15 = arith.constant 0 : index
    %19 = vector.load %arg7[%c0_14, %c0_15] : memref<1x16xf32, #tpu.memory_space<vmem>>, vector<1x16xf32>
    %20 = arith.truncf %17 : vector<16x128xf32> to vector<16x128xbf16>
    %cst_16 = arith.constant dense<0.000000e+00> : vector<16x16xf32>
    %21 = tpu.matmul %20, %18, %cst_16 {dimension_numbers = #tpu.dot_dimension_numbers<[1], [0], [0], [1], [0, 0, 1, 1], [], []>} : vector<16x128xbf16>, vector<128x16xbf16>, vector<16x16xf32> -> vector<16x16xf32>
    %22 = vector.broadcast %19 : vector<1x16xf32> to vector<16x16xf32>
    %23 = arith.addf %21, %22 : vector<16x16xf32>
    %c0_17 = arith.constant 0 : index
    %c0_18 = arith.constant 0 : index
    %24 = vector.load %arg8[%c0_17, %c0_18] : memref<16x16xf32, #tpu.memory_space<vmem>>, vector<16x16xf32>
    tpu.vector_store %arg8[%c0_17, %c0_18], %23 {strides = array<i32>} : memref<16x16xf32, #tpu.memory_space<vmem>>, vector<16x16xf32>,
    return
  }
  func.func @transform_0(%arg0: i32) -> (i32, i32) {
    %c0_i32 = arith.constant 0 : i32
    %c0_i32_0 = arith.constant 0 : i32
    return %arg0, %c0_i32 : i32, i32
  }
  func.func @transform_1(%arg0: i32) -> (i32, i32) {
    %c0_i32 = arith.constant 0 : i32
    %c0_i32_0 = arith.constant 0 : i32
    %c0_i32_1 = arith.constant 0 : i32
    return %c0_i32, %c0_i32_0 : i32, i32
  }
  func.func @transform_2(%arg0: i32) -> (i32, i32) {
    %c0_i32 = arith.constant 0 : i32
    %c0_i32_0 = arith.constant 0 : i32
    %c0_i32_1 = arith.constant 0 : i32
    return %c0_i32, %c0_i32_0 : i32, i32
  }
  func.func @transform_3(%arg0: i32) -> (i32, i32) {
    %c0_i32 = arith.constant 0 : i32
    %c0_i32_0 = arith.constant 0 : i32
    %c0_i32_1 = arith.constant 0 : i32
    return %c0_i32, %c0_i32_0 : i32, i32
  }
  func.func @transform_4(%arg0: i32) -> (i32, i32) {
    %c0_i32 = arith.constant 0 : i32
    %c0_i32_0 = arith.constant 0 : i32
    %c0_i32_1 = arith.constant 0 : i32
    return %c0_i32, %c0_i32_0 : i32, i32
  }
  func.func @transform_5(%arg0: i32) -> (i32, i32) {
    %c0_i32 = arith.constant 0 : i32
    %c0_i32_0 = arith.constant 0 : i32
    %c0_i32_1 = arith.constant 0 : i32
    return %c0_i32, %c0_i32_0 : i32, i32
  }
  func.func @transform_6(%arg0: i32) -> (i32, i32) {
    %c0_i32 = arith.constant 0 : i32
    %c0_i32_0 = arith.constant 0 : i32
    %c0_i32_1 = arith.constant 0 : i32
    return %c0_i32, %c0_i32_0 : i32, i32
  }
  func.func @transform_7(%arg0: i32) -> (i32, i32) {
    %c0_i32 = arith.constant 0 : i32
    %c0_i32_0 = arith.constant 0 : i32
    return %arg0, %c0_i32 : i32, i32
  }
}

module attributes {stable_mosaic.version = 11 : i64} {
  func.func @kernel(%arg0: i32, %arg1: memref<16x32xbf16, #tpu.memory_space<vmem>>, %arg2: memref<32x128xbf16, #tpu.memory_space<vmem>>, %arg3: memref<1x128xf32, #tpu.memory_space<vmem>>, %arg4: memref<128x128xbf16, #tpu.memory_space<vmem>>, %arg5: memref<1x128xf32, #tpu.memory_space<vmem>>, %arg6: memref<128x16xbf16, #tpu.memory_space<vmem>>, %arg7: memref<1x16xf32, #tpu.memory_space<vmem>>, %arg8: memref<16x16xf32, #tpu.memory_space<vmem>>) attributes {dimension_semantics = [#tpu.dimension_semantics<parallel>], iteration_bounds = array<i64: 1>, scalar_prefetch = 0 : i64, scratch_operands = 0 : i64, tpu.core_type = #tpu.core_type<tc>, window_params = [{transform_indices = @transform_0, window_bounds = array<i64: 16, 32>}, {pipeline_mode = #tpu.pipeline_mode<synchronous>, transform_indices = @transform_1, window_bounds = array<i64: 32, 128>}, {pipeline_mode = #tpu.pipeline_mode<synchronous>, transform_indices = @transform_2, window_bounds = array<i64: 1, 128>}, {pipeline_mode = #tpu.pipeline_mode<synchronous>, transform_indices = @transform_3, window_bounds = array<i64: 128, 128>}, {pipeline_mode = #tpu.pipeline_mode<synchronous>, transform_indices = @transform_4, window_bounds = array<i64: 1, 128>}, {pipeline_mode = #tpu.pipeline_mode<synchronous>, transform_indices = @transform_5, window_bounds = array<i64: 128, 16>}, {pipeline_mode = #tpu.pipeline_mode<synchronous>, transform_indices = @transform_6, window_bounds = array<i64: 1, 16>}, {transform_indices = @transform_7, window_bounds = array<i64: 16, 16>}]} {
    %c0 = arith.constant 0 : index
    %c0_0 = arith.constant 0 : index
    %0 = vector.load %arg1[%c0, %c0_0] : memref<16x32xbf16, #tpu.memory_space<vmem>>, vector<16x32xbf16>
    %c0_1 = arith.constant 0 : index
    %c0_2 = arith.constant 0 : index
    %1 = vector.load %arg2[%c0_1, %c0_2] : memref<32x128xbf16, #tpu.memory_space<vmem>>, vector<32x128xbf16>
    %c0_3 = arith.constant 0 : index
    %c0_4 = arith.constant 0 : index
    %2 = vector.load %arg3[%c0_3, %c0_4] : memref<1x128xf32, #tpu.memory_space<vmem>>, vector<1x128xf32>
    %cst = arith.constant dense<0.000000e+00> : vector<16x128xf32>
    %3 = tpu.matmul %0, %1, %cst {dimension_numbers = #tpu.dot_dimension_numbers<[1], [0], [0], [1], [0, 0, 1, 1], [], []>} : vector<16x32xbf16>, vector<32x128xbf16>, vector<16x128xf32> -> vector<16x128xf32>
    %4 = vector.broadcast %2 : vector<1x128xf32> to vector<16x128xf32>
    %5 = arith.addf %3, %4 : vector<16x128xf32>
    %cst_5 = arith.constant 0.00999999977 : f32
    %6 = vector.broadcast %cst_5 : f32 to vector<16x128xf32>
    %7 = arith.mulf %6, %5 : vector<16x128xf32>
    %8 = arith.maximumf %5, %7 : vector<16x128xf32>
    %c0_6 = arith.constant 0 : index
    %c0_7 = arith.constant 0 : index
    %9 = vector.load %arg4[%c0_6, %c0_7] : memref<128x128xbf16, #tpu.memory_space<vmem>>, vector<128x128xbf16>
    %c0_8 = arith.constant 0 : index
    %c0_9 = arith.constant 0 : index
    %10 = vector.load %arg5[%c0_8, %c0_9] : memref<1x128xf32, #tpu.memory_space<vmem>>, vector<1x128xf32>
    %11 = arith.truncf %8 : vector<16x128xf32> to vector<16x128xbf16>
    %cst_10 = arith.constant dense<0.000000e+00> : vector<16x128xf32>
    %12 = tpu.matmul %11, %9, %cst_10 {dimension_numbers = #tpu.dot_dimension_numbers<[1], [0], [0], [1], [0, 0, 1, 1], [], []>} : vector<16x128xbf16>, vector<128x128xbf16>, vector<16x128xf32> -> vector<16x128xf32>
    %13 = vector.broadcast %10 : vector<1x128xf32> to vector<16x128xf32>
    %14 = arith.addf %12, %13 : vector<16x128xf32>
    %cst_11 = arith.constant 0.00999999977 : f32
    %15 = vector.broadcast %cst_11 : f32 to vector<16x128xf32>
    %16 = arith.mulf %15, %14 : vector<16x128xf32>
    %17 = arith.maximumf %14, %16 : vector<16x128xf32>
    %c0_12 = arith.constant 0 : index
    %c0_13 = arith.constant 0 : index
    %18 = vector.load %arg6[%c0_12, %c0_13] : memref<128x16xbf16, #tpu.memory_space<vmem>>, vector<128x16xbf16>
    %c0_14 = arith.constant 0 : index
    %c0_15 = arith.constant 0 : index
    %19 = vector.load %arg7[%c0_14, %c0_15] : memref<1x16xf32, #tpu.memory_space<vmem>>, vector<1x16xf32>
    %20 = arith.truncf %17 : vector<16x128xf32> to vector<16x128xbf16>
    %cst_16 = arith.constant dense<0.000000e+00> : vector<16x16xf32>
    %21 = tpu.matmul %20, %18, %cst_16 {dimension_numbers = #tpu.dot_dimension_numbers<[1], [0], [0], [1], [0, 0, 1, 1], [], []>} : vector<16x128xbf16>, vector<128x16xbf16>, vector<16x16xf32> -> vector<16x16xf32>
    %22 = vector.broadcast %19 : vector<1x16xf32> to vector<16x16xf32>
    %23 = arith.addf %21, %22 : vector<16x16xf32>
    %c0_17 = arith.constant 0 : index
    %c0_18 = arith.constant 0 : index
    %24 = vector.load %arg8[%c0_17, %c0_18] : memref<16x16xf32, #tpu.memory_space<vmem>>, vector<16x16xf32>
    tpu.vector_store %arg8[%c0_17, %c0_18], %23 {strides = array<i32>} : memref<16x16xf32, #tpu.memory_space<vmem>>, vector<16x16xf32>,
    return
  }
  func.func @transform_0(%arg0: i32) -> (i32, i32) {
    %c0_i32 = arith.constant 0 : i32
    %c0_i32_0 = arith.constant 0 : i32
    return %arg0, %c0_i32 : i32, i32
  }
  func.func @transform_1(%arg0: i32) -> (i32, i32) {
    %c0_i32 = arith.constant 0 : i32
    %c0_i32_0 = arith.constant 0 : i32
    %c0_i32_1 = arith.constant 0 : i32
    return %c0_i32, %c0_i32_0 : i32, i32
  }
  func.func @transform_2(%arg0: i32) -> (i32, i32) {
    %c0_i32 = arith.constant 0 : i32
    %c0_i32_0 = arith.constant 0 : i32
    %c0_i32_1 = arith.constant 0 : i32
    return %c0_i32, %c0_i32_0 : i32, i32
  }
  func.func @transform_3(%arg0: i32) -> (i32, i32) {
    %c0_i32 = arith.constant 0 : i32
    %c0_i32_0 = arith.constant 0 : i32
    %c0_i32_1 = arith.constant 0 : i32
    return %c0_i32, %c0_i32_0 : i32, i32
  }
  func.func @transform_4(%arg0: i32) -> (i32, i32) {
    %c0_i32 = arith.constant 0 : i32
    %c0_i32_0 = arith.constant 0 : i32
    %c0_i32_1 = arith.constant 0 : i32
    return %c0_i32, %c0_i32_0 : i32, i32
  }
  func.func @transform_5(%arg0: i32) -> (i32, i32) {
    %c0_i32 = arith.constant 0 : i32
    %c0_i32_0 = arith.constant 0 : i32
    %c0_i32_1 = arith.constant 0 : i32
    return %c0_i32, %c0_i32_0 : i32, i32
  }
  func.func @transform_6(%arg0: i32) -> (i32, i32) {
    %c0_i32 = arith.constant 0 : i32
    %c0_i32_0 = arith.constant 0 : i32
    %c0_i32_1 = arith.constant 0 : i32
    return %c0_i32, %c0_i32_0 : i32, i32
  }
  func.func @transform_7(%arg0: i32) -> (i32, i32) {
    %c0_i32 = arith.constant 0 : i32
    %c0_i32_0 = arith.constant 0 : i32
    return %arg0, %c0_i32 : i32, i32
  }
}

</mosaic_0001>

<llo_original>
// kernel: tpu_custom_call.1
$region0: #{tpu_custom_call.1}
  #allocation0 [shape = 'u32[]', space=smem, size = 0x4, offset = 0x4, fixed_abs, tag = 'smem constant byte address 0x4 - core index']
  #allocation1 [shape = 'u32[72,128]{1,0:T(1,128)}', space=vmem, size = 0x9000, scoped, tag = 'internal scratch']
  %s0 = inlined_call_operand.vmem [shape: bf16[16,32], index: 0, kind: input, shape index: {}]
  %s1 = inlined_call_operand.hbm [shape: bf16[32,128], index: 1, kind: input, shape index: {}]
  %s2 = inlined_call_operand.vmem [shape: f32[1,128], index: 2, kind: input, shape index: {}]
  %s3 = inlined_call_operand.vmem [shape: bf16[128,128], index: 3, kind: input, shape index: {}]
  %s4 = inlined_call_operand.vmem [shape: f32[1,128], index: 4, kind: input, shape index: {}]
  %s5 = inlined_call_operand.vmem [shape: bf16[128,16], index: 5, kind: input, shape index: {}]
  %s6 = inlined_call_operand.vmem [shape: f32[1,16], index: 6, kind: input, shape index: {}]
  %s7 = inlined_call_operand.hbm [shape: f32[16,16], index: 7, kind: output, shape index: {}]
  %s8 = sld [smem:[#allocation0]]
  $region42: #{tpu_custom_call.1} parent=0
    _
  %s10 = ssub.s32 1, %s8
  %s11 = scalar_select 0, %s10, %s8
  $region1: #{tpu_custom_call.1} parent=0
    #allocation2 [shape = 'u8[8192]{0}', space=vmem, size = 0x2000, scoped, tag = 'input window, operand 1, single buffered']
    #allocation3 [shape = 's32[1]{0}', space=sflag, size = 0x4, scoped, tag = 'scoped memory for tpu_custom_call.1']
    #allocation4 [shape = 's32[1]{0}', space=sflag, size = 0x4, scoped, tag = 'scoped memory for tpu_custom_call.1']
    #allocation5 [shape = 'u8[8192]{0}', space=vmem, size = 0x2000, scoped, tag = 'output window, operand 0, single buffered']
    %12 = vsyncpa [#allocation3], 0
    %13 = vsyncpa [#allocation4], 0
    // Predicated region
    $region2: #{tpu_custom_call.1} parent=1 // pred_check
      _
    $region3: #{tpu_custom_call.1} parent=1 // pred_check_branch
      %15 = sbr.rel (0) target = $region5
    $region4: #{tpu_custom_call.1} parent=1 // pred_region
      _
    $region5: #{tpu_custom_call.1} parent=1 // pred_fallthru
      _
    // Predicated region
    $region6: #{tpu_custom_call.1} parent=1 // pred_check
      _
    $region7: #{tpu_custom_call.1} parent=1 // pred_check_branch
      %17 = sbr.rel (0) target = $region9
    $region8: #{tpu_custom_call.1} parent=1 // pred_region
      %19 = vsyncadd [#allocation3], 0
      %s20 = sshll.u32 %s1, 4
      %s21 = int_to_ptr.hbm [resolvable:$true] %s20
      %s22 = sshll.u32 [#allocation2], 4
      %s23 = int_to_ptr.vmem [resolvable:$true] %s22
      %28 = dma.hbm_to_vmem [thread:$0]  %s21, 256, %s23, [#allocation3], 64, 64, 4
    $region9: #{tpu_custom_call.1} parent=1 // pred_fallthru
      _
    // Predicated region
    $region10: #{tpu_custom_call.1} parent=1 // pred_check
      _
    $region11: #{tpu_custom_call.1} parent=1 // pred_check_branch
      %30 = sbr.rel (0) target = $region13
    $region12: #{tpu_custom_call.1} parent=1 // pred_region
      _
    $region13: #{tpu_custom_call.1} parent=1 // pred_fallthru
      _
    // Predicated region
    $region14: #{tpu_custom_call.1} parent=1 // pred_check
      _
    $region15: #{tpu_custom_call.1} parent=1 // pred_check_branch
      %32 = sbr.rel (0) target = $region17
    $region16: #{tpu_custom_call.1} parent=1 // pred_region
      _
    $region17: #{tpu_custom_call.1} parent=1 // pred_fallthru
      _
    // Predicated region
    $region18: #{tpu_custom_call.1} parent=1 // pred_check
      _
    $region19: #{tpu_custom_call.1} parent=1 // pred_check_branch
      %34 = sbr.rel (0) target = $region21
    $region20: #{tpu_custom_call.1} parent=1 // pred_region
      _
    $region21: #{tpu_custom_call.1} parent=1 // pred_fallthru
      _
    // Predicated region
    $region22: #{tpu_custom_call.1} parent=1 // pred_check
      _
    $region23: #{tpu_custom_call.1} parent=1 // pred_check_branch
      %36 = sbr.rel (0) target = $region25
    $region24: #{tpu_custom_call.1} parent=1 // pred_region
      _
    $region25: #{tpu_custom_call.1} parent=1 // pred_fallthru
      _
    // Predicated region
    $region26: #{tpu_custom_call.1} parent=1 // pred_check
      _
    $region27: #{tpu_custom_call.1} parent=1 // pred_check_branch
      %38 = sbr.rel (0) target = $region29
    $region28: #{tpu_custom_call.1} parent=1 // pred_region
      _
    $region29: #{tpu_custom_call.1} parent=1 // pred_fallthru
      _
    // Predicated region
    $region30: #{tpu_custom_call.1} parent=1 // pred_check
      _
    $region31: #{tpu_custom_call.1} parent=1 // pred_check_branch
      %40 = sbr.rel (0) target = $region33
    $region32: #{tpu_custom_call.1} parent=1 // pred_region
      %42 = dma.done [#allocation3], 256
    $region33: #{tpu_custom_call.1} parent=1 // pred_fallthru
      _
    %v44 = vld [vmem:[%s0] sm:$0xf]
    %v45 = vld [vmem:[%s0 + $0x4] sm:$0xf]
    %v46 = vld [vmem:[#allocation2] sm:$0xf]
    %v47 = vld [vmem:[#allocation2 + $0x4] sm:$0xf]
    %v48 = vld [vmem:[#allocation2 + $0x8] sm:$0xf]
    %v49 = vld [vmem:[#allocation2 + $0xc] sm:$0xf]
    %v50 = vld [vmem:[%s2] sm:$0x1]
    %v52 = vperm.slane %v50, 0
    %v56 = vunpack.c.l.b16 %v44
    %v57 = vunpack.c.l.b16 %v45
    %v58 = vpack.c.b16 %v57, %v56
    %v63 = vunpack.c.l.b16 %v46
    %v64 = vunpack.c.l.b16 %v47
    %v65 = vunpack.c.l.b16 %v48
    %v66 = vunpack.c.l.b16 %v49
    %v67 = vpack.c.b16 %v64, %v63
    %v68 = vpack.c.b16 %v66, %v65
    %vm71 = vcmask 261120
    %v73 = vsel %vm71, %v58, 0
    %75 = vmatpush.bf16.msra.mxu0 0
    %76 = vmatpush.bf16.msra.mxu0 0
    %77 = vmatpush.bf16.msra.mxu0 0
    %78 = vmatpush.bf16.msra.mxu0 0
    %79 = vmatpush.bf16.msra.mxu0 0
    %80 = vmatpush.bf16.msra.mxu0 0
    %81 = vmatpush.bf16.msra.mxu0 %v68
    %82 = vmatpush.bf16.msra.mxu0 %v67
    %83 = vmatmul.bf16.gmra.mxu0 %v73
    %v84 = vpop.f32.mrf.mxu0
    %v85 = vadd.f32 %v52, %v84
    %v86 = vpop.f32.mrf.mxu0
    %v87 = vadd.f32 %v52, %v86
    %88 = vdwg.mxu0
    %v89 = vmul.f32 %v85, 0.01
    %v90 = vmul.f32 %v87, 0.01
    %v91 = vmax.f32 %v85, %v89
    %v92 = vmax.f32 %v87, %v90
    %v93 = vld [vmem:[%s3] sm:$0xf]
    %v94 = vld [vmem:[%s3 + $0x4] sm:$0xf]
    %v95 = vld [vmem:[%s3 + $0x8] sm:$0xf]
    %v96 = vld [vmem:[%s3 + $0xc] sm:$0xf]
    %v97 = vld [vmem:[%s3 + $0x10] sm:$0xf]
    %v98 = vld [vmem:[%s3 + $0x14] sm:$0xf]
    %v99 = vld [vmem:[%s3 + $0x18] sm:$0xf]
    %v100 = vld [vmem:[%s3 + $0x1c] sm:$0xf]
    %v101 = vld [vmem:[%s3 + $0x20] sm:$0xf]
    %v102 = vld [vmem:[%s3 + $0x24] sm:$0xf]
    %v103 = vld [vmem:[%s3 + $0x28] sm:$0xf]
    %v104 = vld [vmem:[%s3 + $0x2c] sm:$0xf]
    %v105 = vld [vmem:[%s3 + $0x30] sm:$0xf]
    %v106 = vld [vmem:[%s3 + $0x34] sm:$0xf]
    %v107 = vld [vmem:[%s3 + $0x38] sm:$0xf]
    %v108 = vld [vmem:[%s3 + $0x3c] sm:$0xf]
    %v109 = vld [vmem:[%s4] sm:$0x1]
    %v110 = vpack.c.bf16 %v92, %v91
    %v112 = vperm.slane %v109, 0
    %v130 = vunpack.c.l.b16 %v93
    %v131 = vunpack.c.l.b16 %v94
    %v132 = vunpack.c.l.b16 %v95
    %v133 = vunpack.c.l.b16 %v96
    %v134 = vunpack.c.l.b16 %v97
    %v135 = vunpack.c.l.b16 %v98
    %v136 = vunpack.c.l.b16 %v99
    %v137 = vunpack.c.l.b16 %v100
    %v138 = vunpack.c.l.b16 %v101
    %v139 = vunpack.c.l.b16 %v102
    %v140 = vunpack.c.l.b16 %v103
    %v141 = vunpack.c.l.b16 %v104
    %v142 = vunpack.c.l.b16 %v105
    %v143 = vunpack.c.l.b16 %v106
    %v144 = vunpack.c.l.b16 %v107
    %v145 = vunpack.c.l.b16 %v108
    %v146 = vpack.c.b16 %v131, %v130
    %v147 = vpack.c.b16 %v133, %v132
    %v148 = vpack.c.b16 %v135, %v134
    %v149 = vpack.c.b16 %v137, %v136
    %v150 = vpack.c.b16 %v139, %v138
    %v151 = vpack.c.b16 %v141, %v140
    %v152 = vpack.c.b16 %v143, %v142
    %v153 = vpack.c.b16 %v145, %v144
    %162 = vmatpush.bf16.msra.mxu0 %v153
    %163 = vmatpush.bf16.msra.mxu0 %v152
    %164 = vmatpush.bf16.msra.mxu0 %v151
    %165 = vmatpush.bf16.msra.mxu0 %v150
    %166 = vmatpush.bf16.msra.mxu0 %v149
    %167 = vmatpush.bf16.msra.mxu0 %v148
    %168 = vmatpush.bf16.msra.mxu0 %v147
    %169 = vmatpush.bf16.msra.mxu0 %v146
    %170 = vmatmul.bf16.gmra.mxu0 %v110
    %v171 = vpop.f32.mrf.mxu0
    %v172 = vadd.f32 %v112, %v171
    %v173 = vpop.f32.mrf.mxu0
    %v174 = vadd.f32 %v112, %v173
    %175 = vdwg.mxu0
    %v176 = vmul.f32 %v172, 0.01
    %v177 = vmul.f32 %v174, 0.01
    %v178 = vmax.f32 %v172, %v176
    %v179 = vmax.f32 %v174, %v177
    %v180 = vld [vmem:[%s5] sm:$0xf]
    %v181 = vld [vmem:[%s5 + $0x4] sm:$0xf]
    %v182 = vld [vmem:[%s5 + $0x8] sm:$0xf]
    %v183 = vld [vmem:[%s5 + $0xc] sm:$0xf]
    %v184 = vld [vmem:[%s5 + $0x10] sm:$0xf]
    %v185 = vld [vmem:[%s5 + $0x14] sm:$0xf]
    %v186 = vld [vmem:[%s5 + $0x18] sm:$0xf]
    %v187 = vld [vmem:[%s5 + $0x1c] sm:$0xf]
    %v188 = vld [vmem:[%s5 + $0x20] sm:$0xf]
    %v189 = vld [vmem:[%s5 + $0x24] sm:$0xf]
    %v190 = vld [vmem:[%s5 + $0x28] sm:$0xf]
    %v191 = vld [vmem:[%s5 + $0x2c] sm:$0xf]
    %v192 = vld [vmem:[%s5 + $0x30] sm:$0xf]
    %v193 = vld [vmem:[%s5 + $0x34] sm:$0xf]
    %v194 = vld [vmem:[%s5 + $0x38] sm:$0xf]
    %v195 = vld [vmem:[%s5 + $0x3c] sm:$0xf]
    %v196 = vld [vmem:[%s6] sm:$0x1]
    %v197 = vpack.c.bf16 %v179, %v178
    %v199 = vperm.slane %v196, 0
    %v217 = vunpack.c.l.b16 %v180
    %v218 = vunpack.c.l.b16 %v181
    %v219 = vunpack.c.l.b16 %v182
    %v220 = vunpack.c.l.b16 %v183
    %v221 = vunpack.c.l.b16 %v184
    %v222 = vunpack.c.l.b16 %v185
    %v223 = vunpack.c.l.b16 %v186
    %v224 = vunpack.c.l.b16 %v187
    %v225 = vunpack.c.l.b16 %v188
    %v226 = vunpack.c.l.b16 %v189
    %v227 = vunpack.c.l.b16 %v190
    %v228 = vunpack.c.l.b16 %v191
    %v229 = vunpack.c.l.b16 %v192
    %v230 = vunpack.c.l.b16 %v193
    %v231 = vunpack.c.l.b16 %v194
    %v232 = vunpack.c.l.b16 %v195
    %v233 = vpack.c.b16 %v218, %v217
    %v234 = vpack.c.b16 %v220, %v219
    %v235 = vpack.c.b16 %v222, %v221
    %v236 = vpack.c.b16 %v224, %v223
    %v237 = vpack.c.b16 %v226, %v225
    %v238 = vpack.c.b16 %v228, %v227
    %v239 = vpack.c.b16 %v230, %v229
    %v240 = vpack.c.b16 %v232, %v231
    %249 = vmatpush.bf16.msra.mxu0 %v240
    %250 = vmatpush.bf16.msra.mxu0 %v239
    %251 = vmatpush.bf16.msra.mxu0 %v238
    %252 = vmatpush.bf16.msra.mxu0 %v237
    %253 = vmatpush.bf16.msra.mxu0 %v236
    %254 = vmatpush.bf16.msra.mxu0 %v235
    %255 = vmatpush.bf16.msra.mxu0 %v234
    %256 = vmatpush.bf16.msra.mxu0 %v233
    %257 = vmatmul.bf16.gmra.mxu0 %v197
    %v258 = vpop.f32.mrf.mxu0
    %v259 = vadd.f32 %v199, %v258
    %v260 = vpop.f32.mrf.mxu0
    %v261 = vadd.f32 %v199, %v260
    %262 = vdwg.mxu0
    %vm263 = vcmask 130048
    %264 = vst.msk [vmem:[#allocation5] sm:$0xff] %vm263, %v259
    %265 = vst.msk [vmem:[#allocation5 + $0x8] sm:$0xff] %vm263, %v261
    // Predicated region
    $region34: #{tpu_custom_call.1} parent=1 // pred_check
      _
    $region35: #{tpu_custom_call.1} parent=1 // pred_check_branch
      %267 = sbr.rel (0) target = $region37
    $region36: #{tpu_custom_call.1} parent=1 // pred_region
      %269 = vsyncadd [#allocation4], 0
      %s270 = sshll.u32 [#allocation5], 4
      %s271 = int_to_ptr.vmem [resolvable:$true] %s270
      %s272 = sshll.u32 %s7, 4
      %s273 = int_to_ptr.hbm [resolvable:$true] %s272
      %278 = dma.vmem_to_hbm [thread:$0]  %s271, 256, %s273, [#allocation4], 128, 128, 8
    $region37: #{tpu_custom_call.1} parent=1 // pred_fallthru
      _
    // Predicated region
    $region38: #{tpu_custom_call.1} parent=1 // pred_check
      _
    $region39: #{tpu_custom_call.1} parent=1 // pred_check_branch
      %280 = sbr.rel (0) target = $region41
    $region40: #{tpu_custom_call.1} parent=1 // pred_region
      %282 = dma.done [#allocation4], 256
    $region41: #{tpu_custom_call.1} parent=1 // pred_fallthru
      _
    %283 = vsyncpa [#allocation3], 1
    %284 = vsyncpa [#allocation4], 1

// kernel: tpu_custom_call.1
$region0: #{tpu_custom_call.1}
  #allocation0 [shape = 'u32[]', space=smem, size = 0x4, offset = 0x4, fixed_abs, tag = 'smem constant byte address 0x4 - core index']
  #allocation1 [shape = 'u32[72,128]{1,0:T(1,128)}', space=vmem, size = 0x9000, scoped, tag = 'internal scratch']
  %s0 = inlined_call_operand.vmem [shape: bf16[16,32], index: 0, kind: input, shape index: {}]
  %s1 = inlined_call_operand.hbm [shape: bf16[32,128], index: 1, kind: input, shape index: {}]
  %s2 = inlined_call_operand.vmem [shape: f32[1,128], index: 2, kind: input, shape index: {}]
  %s3 = inlined_call_operand.vmem [shape: bf16[128,128], index: 3, kind: input, shape index: {}]
  %s4 = inlined_call_operand.vmem [shape: f32[1,128], index: 4, kind: input, shape index: {}]
  %s5 = inlined_call_operand.vmem [shape: bf16[128,16], index: 5, kind: input, shape index: {}]
  %s6 = inlined_call_operand.vmem [shape: f32[1,16], index: 6, kind: input, shape index: {}]
  %s7 = inlined_call_operand.hbm [shape: f32[16,16], index: 7, kind: output, shape index: {}]
  %s8 = sld [smem:[#allocation0]]
  $region42: #{tpu_custom_call.1} parent=0
    _
  %s10 = ssub.s32 1, %s8
  %s11 = scalar_select 0, %s10, %s8
  $region1: #{tpu_custom_call.1} parent=0
    #allocation2 [shape = 'u8[8192]{0}', space=vmem, size = 0x2000, scoped, tag = 'input window, operand 1, single buffered']
    #allocation3 [shape = 's32[1]{0}', space=sflag, size = 0x4, scoped, tag = 'scoped memory for tpu_custom_call.1']
    #allocation4 [shape = 's32[1]{0}', space=sflag, size = 0x4, scoped, tag = 'scoped memory for tpu_custom_call.1']
    #allocation5 [shape = 'u8[8192]{0}', space=vmem, size = 0x2000, scoped, tag = 'output window, operand 0, single buffered']
    %12 = vsyncpa [#allocation3], 0
    %13 = vsyncpa [#allocation4], 0
    // Predicated region
    $region2: #{tpu_custom_call.1} parent=1 // pred_check
      _
    $region3: #{tpu_custom_call.1} parent=1 // pred_check_branch
      %15 = sbr.rel (0) target = $region5
    $region4: #{tpu_custom_call.1} parent=1 // pred_region
      _
    $region5: #{tpu_custom_call.1} parent=1 // pred_fallthru
      _
    // Predicated region
    $region6: #{tpu_custom_call.1} parent=1 // pred_check
      _
    $region7: #{tpu_custom_call.1} parent=1 // pred_check_branch
      %17 = sbr.rel (0) target = $region9
    $region8: #{tpu_custom_call.1} parent=1 // pred_region
      %19 = vsyncadd [#allocation3], 0
      %s20 = sshll.u32 %s1, 4
      %s21 = int_to_ptr.hbm [resolvable:$true] %s20
      %s22 = sshll.u32 [#allocation2], 4
      %s23 = int_to_ptr.vmem [resolvable:$true] %s22
      %28 = dma.hbm_to_vmem [thread:$0]  %s21, 256, %s23, [#allocation3], 64, 64, 4
    $region9: #{tpu_custom_call.1} parent=1 // pred_fallthru
      _
    // Predicated region
    $region10: #{tpu_custom_call.1} parent=1 // pred_check
      _
    $region11: #{tpu_custom_call.1} parent=1 // pred_check_branch
      %30 = sbr.rel (0) target = $region13
    $region12: #{tpu_custom_call.1} parent=1 // pred_region
      _
    $region13: #{tpu_custom_call.1} parent=1 // pred_fallthru
      _
    // Predicated region
    $region14: #{tpu_custom_call.1} parent=1 // pred_check
      _
    $region15: #{tpu_custom_call.1} parent=1 // pred_check_branch
      %32 = sbr.rel (0) target = $region17
    $region16: #{tpu_custom_call.1} parent=1 // pred_region
      _
    $region17: #{tpu_custom_call.1} parent=1 // pred_fallthru
      _
    // Predicated region
    $region18: #{tpu_custom_call.1} parent=1 // pred_check
      _
    $region19: #{tpu_custom_call.1} parent=1 // pred_check_branch
      %34 = sbr.rel (0) target = $region21
    $region20: #{tpu_custom_call.1} parent=1 // pred_region
      _
    $region21: #{tpu_custom_call.1} parent=1 // pred_fallthru
      _
    // Predicated region
    $region22: #{tpu_custom_call.1} parent=1 // pred_check
      _
    $region23: #{tpu_custom_call.1} parent=1 // pred_check_branch
      %36 = sbr.rel (0) target = $region25
    $region24: #{tpu_custom_call.1} parent=1 // pred_region
      _
    $region25: #{tpu_custom_call.1} parent=1 // pred_fallthru
      _
    // Predicated region
    $region26: #{tpu_custom_call.1} parent=1 // pred_check
      _
    $region27: #{tpu_custom_call.1} parent=1 // pred_check_branch
      %38 = sbr.rel (0) target = $region29
    $region28: #{tpu_custom_call.1} parent=1 // pred_region
      _
    $region29: #{tpu_custom_call.1} parent=1 // pred_fallthru
      _
    // Predicated region
    $region30: #{tpu_custom_call.1} parent=1 // pred_check
      _
    $region31: #{tpu_custom_call.1} parent=1 // pred_check_branch
      %40 = sbr.rel (0) target = $region33
    $region32: #{tpu_custom_call.1} parent=1 // pred_region
      %42 = dma.done [#allocation3], 256
    $region33: #{tpu_custom_call.1} parent=1 // pred_fallthru
      _
    %v44 = vld [vmem:[%s0] sm:$0xf]
    %v45 = vld [vmem:[%s0 + $0x4] sm:$0xf]
    %v46 = vld [vmem:[#allocation2] sm:$0xf]
    %v47 = vld [vmem:[#allocation2 + $0x4] sm:$0xf]
    %v48 = vld [vmem:[#allocation2 + $0x8] sm:$0xf]
    %v49 = vld [vmem:[#allocation2 + $0xc] sm:$0xf]
    %v50 = vld [vmem:[%s2] sm:$0x1]
    %v52 = vperm.slane %v50, 0
    %v56 = vunpack.c.l.b16 %v44
    %v57 = vunpack.c.l.b16 %v45
    %v58 = vpack.c.b16 %v57, %v56
    %v63 = vunpack.c.l.b16 %v46
    %v64 = vunpack.c.l.b16 %v47
    %v65 = vunpack.c.l.b16 %v48
    %v66 = vunpack.c.l.b16 %v49
    %v67 = vpack.c.b16 %v64, %v63
    %v68 = vpack.c.b16 %v66, %v65
    %vm71 = vcmask 261120
    %v73 = vsel %vm71, %v58, 0
    %75 = vmatpush.bf16.msra.mxu0 0
    %76 = vmatpush.bf16.msra.mxu0 0
    %77 = vmatpush.bf16.msra.mxu0 0
    %78 = vmatpush.bf16.msra.mxu0 0
    %79 = vmatpush.bf16.msra.mxu0 0
    %80 = vmatpush.bf16.msra.mxu0 0
    %81 = vmatpush.bf16.msra.mxu0 %v68
    %82 = vmatpush.bf16.msra.mxu0 %v67
    %83 = vmatmul.bf16.gmra.mxu0 %v73
    %v84 = vpop.f32.mrf.mxu0
    %v85 = vadd.f32 %v52, %v84
    %v86 = vpop.f32.mrf.mxu0
    %v87 = vadd.f32 %v52, %v86
    %88 = vdwg.mxu0
    %v89 = vmul.f32 %v85, 0.01
    %v90 = vmul.f32 %v87, 0.01
    %v91 = vmax.f32 %v85, %v89
    %v92 = vmax.f32 %v87, %v90
    %v93 = vld [vmem:[%s3] sm:$0xf]
    %v94 = vld [vmem:[%s3 + $0x4] sm:$0xf]
    %v95 = vld [vmem:[%s3 + $0x8] sm:$0xf]
    %v96 = vld [vmem:[%s3 + $0xc] sm:$0xf]
    %v97 = vld [vmem:[%s3 + $0x10] sm:$0xf]
    %v98 = vld [vmem:[%s3 + $0x14] sm:$0xf]
    %v99 = vld [vmem:[%s3 + $0x18] sm:$0xf]
    %v100 = vld [vmem:[%s3 + $0x1c] sm:$0xf]
    %v101 = vld [vmem:[%s3 + $0x20] sm:$0xf]
    %v102 = vld [vmem:[%s3 + $0x24] sm:$0xf]
    %v103 = vld [vmem:[%s3 + $0x28] sm:$0xf]
    %v104 = vld [vmem:[%s3 + $0x2c] sm:$0xf]
    %v105 = vld [vmem:[%s3 + $0x30] sm:$0xf]
    %v106 = vld [vmem:[%s3 + $0x34] sm:$0xf]
    %v107 = vld [vmem:[%s3 + $0x38] sm:$0xf]
    %v108 = vld [vmem:[%s3 + $0x3c] sm:$0xf]
    %v109 = vld [vmem:[%s4] sm:$0x1]
    %v110 = vpack.c.bf16 %v92, %v91
    %v112 = vperm.slane %v109, 0
    %v130 = vunpack.c.l.b16 %v93
    %v131 = vunpack.c.l.b16 %v94
    %v132 = vunpack.c.l.b16 %v95
    %v133 = vunpack.c.l.b16 %v96
    %v134 = vunpack.c.l.b16 %v97
    %v135 = vunpack.c.l.b16 %v98
    %v136 = vunpack.c.l.b16 %v99
    %v137 = vunpack.c.l.b16 %v100
    %v138 = vunpack.c.l.b16 %v101
    %v139 = vunpack.c.l.b16 %v102
    %v140 = vunpack.c.l.b16 %v103
    %v141 = vunpack.c.l.b16 %v104
    %v142 = vunpack.c.l.b16 %v105
    %v143 = vunpack.c.l.b16 %v106
    %v144 = vunpack.c.l.b16 %v107
    %v145 = vunpack.c.l.b16 %v108
    %v146 = vpack.c.b16 %v131, %v130
    %v147 = vpack.c.b16 %v133, %v132
    %v148 = vpack.c.b16 %v135, %v134
    %v149 = vpack.c.b16 %v137, %v136
    %v150 = vpack.c.b16 %v139, %v138
    %v151 = vpack.c.b16 %v141, %v140
    %v152 = vpack.c.b16 %v143, %v142
    %v153 = vpack.c.b16 %v145, %v144
    %162 = vmatpush.bf16.msra.mxu0 %v153
    %163 = vmatpush.bf16.msra.mxu0 %v152
    %164 = vmatpush.bf16.msra.mxu0 %v151
    %165 = vmatpush.bf16.msra.mxu0 %v150
    %166 = vmatpush.bf16.msra.mxu0 %v149
    %167 = vmatpush.bf16.msra.mxu0 %v148
    %168 = vmatpush.bf16.msra.mxu0 %v147
    %169 = vmatpush.bf16.msra.mxu0 %v146
    %170 = vmatmul.bf16.gmra.mxu0 %v110
    %v171 = vpop.f32.mrf.mxu0
    %v172 = vadd.f32 %v112, %v171
    %v173 = vpop.f32.mrf.mxu0
    %v174 = vadd.f32 %v112, %v173
    %175 = vdwg.mxu0
    %v176 = vmul.f32 %v172, 0.01
    %v177 = vmul.f32 %v174, 0.01
    %v178 = vmax.f32 %v172, %v176
    %v179 = vmax.f32 %v174, %v177
    %v180 = vld [vmem:[%s5] sm:$0xf]
    %v181 = vld [vmem:[%s5 + $0x4] sm:$0xf]
    %v182 = vld [vmem:[%s5 + $0x8] sm:$0xf]
    %v183 = vld [vmem:[%s5 + $0xc] sm:$0xf]
    %v184 = vld [vmem:[%s5 + $0x10] sm:$0xf]
    %v185 = vld [vmem:[%s5 + $0x14] sm:$0xf]
    %v186 = vld [vmem:[%s5 + $0x18] sm:$0xf]
    %v187 = vld [vmem:[%s5 + $0x1c] sm:$0xf]
    %v188 = vld [vmem:[%s5 + $0x20] sm:$0xf]
    %v189 = vld [vmem:[%s5 + $0x24] sm:$0xf]
    %v190 = vld [vmem:[%s5 + $0x28] sm:$0xf]
    %v191 = vld [vmem:[%s5 + $0x2c] sm:$0xf]
    %v192 = vld [vmem:[%s5 + $0x30] sm:$0xf]
    %v193 = vld [vmem:[%s5 + $0x34] sm:$0xf]
    %v194 = vld [vmem:[%s5 + $0x38] sm:$0xf]
    %v195 = vld [vmem:[%s5 + $0x3c] sm:$0xf]
    %v196 = vld [vmem:[%s6] sm:$0x1]
    %v197 = vpack.c.bf16 %v179, %v178
    %v199 = vperm.slane %v196, 0
    %v217 = vunpack.c.l.b16 %v180
    %v218 = vunpack.c.l.b16 %v181
    %v219 = vunpack.c.l.b16 %v182
    %v220 = vunpack.c.l.b16 %v183
    %v221 = vunpack.c.l.b16 %v184
    %v222 = vunpack.c.l.b16 %v185
    %v223 = vunpack.c.l.b16 %v186
    %v224 = vunpack.c.l.b16 %v187
    %v225 = vunpack.c.l.b16 %v188
    %v226 = vunpack.c.l.b16 %v189
    %v227 = vunpack.c.l.b16 %v190
    %v228 = vunpack.c.l.b16 %v191
    %v229 = vunpack.c.l.b16 %v192
    %v230 = vunpack.c.l.b16 %v193
    %v231 = vunpack.c.l.b16 %v194
    %v232 = vunpack.c.l.b16 %v195
    %v233 = vpack.c.b16 %v218, %v217
    %v234 = vpack.c.b16 %v220, %v219
    %v235 = vpack.c.b16 %v222, %v221
    %v236 = vpack.c.b16 %v224, %v223
    %v237 = vpack.c.b16 %v226, %v225
    %v238 = vpack.c.b16 %v228, %v227
    %v239 = vpack.c.b16 %v230, %v229
    %v240 = vpack.c.b16 %v232, %v231
    %249 = vmatpush.bf16.msra.mxu0 %v240
    %250 = vmatpush.bf16.msra.mxu0 %v239
    %251 = vmatpush.bf16.msra.mxu0 %v238
    %252 = vmatpush.bf16.msra.mxu0 %v237
    %253 = vmatpush.bf16.msra.mxu0 %v236
    %254 = vmatpush.bf16.msra.mxu0 %v235
    %255 = vmatpush.bf16.msra.mxu0 %v234
    %256 = vmatpush.bf16.msra.mxu0 %v233
    %257 = vmatmul.bf16.gmra.mxu0 %v197
    %v258 = vpop.f32.mrf.mxu0
    %v259 = vadd.f32 %v199, %v258
    %v260 = vpop.f32.mrf.mxu0
    %v261 = vadd.f32 %v199, %v260
    %262 = vdwg.mxu0
    %vm263 = vcmask 130048
    %264 = vst.msk [vmem:[#allocation5] sm:$0xff] %vm263, %v259
    %265 = vst.msk [vmem:[#allocation5 + $0x8] sm:$0xff] %vm263, %v261
    // Predicated region
    $region34: #{tpu_custom_call.1} parent=1 // pred_check
      _
    $region35: #{tpu_custom_call.1} parent=1 // pred_check_branch
      %267 = sbr.rel (0) target = $region37
    $region36: #{tpu_custom_call.1} parent=1 // pred_region
      %269 = vsyncadd [#allocation4], 0
      %s270 = sshll.u32 [#allocation5], 4
      %s271 = int_to_ptr.vmem [resolvable:$true] %s270
      %s272 = sshll.u32 %s7, 4
      %s273 = int_to_ptr.hbm [resolvable:$true] %s272
      %278 = dma.vmem_to_hbm [thread:$0]  %s271, 256, %s273, [#allocation4], 128, 128, 8
    $region37: #{tpu_custom_call.1} parent=1 // pred_fallthru
      _
    // Predicated region
    $region38: #{tpu_custom_call.1} parent=1 // pred_check
      _
    $region39: #{tpu_custom_call.1} parent=1 // pred_check_branch
      %280 = sbr.rel (0) target = $region41
    $region40: #{tpu_custom_call.1} parent=1 // pred_region
      %282 = dma.done [#allocation4], 256
    $region41: #{tpu_custom_call.1} parent=1 // pred_fallthru
      _
    %283 = vsyncpa [#allocation3], 1
    %284 = vsyncpa [#allocation4], 1

</llo_original>
